<compile_context>
chip_gen: v5e
topology: v5e:2x2
jax: 0.10.0
libtpu: 0.0.40
codegen_flags: <defaults>
</compile_context>

<pallas_src>
import math
import functools

import jax
import jax.numpy as jnp
from jax.experimental import pallas as pl
from jax.experimental.pallas import tpu as pltpu


# --------------------------------------------------------------------------
# Parameter / buffer construction (plain JAX glue, matches torch __init__)
# --------------------------------------------------------------------------
def build_pe(d_model: int, max_len: int, dtype=jnp.float32):
    position = jnp.arange(max_len, dtype=jnp.float32)[:, None]            # (L, 1)
    div_term = jnp.exp(
        jnp.arange(0, d_model, 2, dtype=jnp.float32) * (-math.log(10000.0) / d_model)
    )                                                                      # (ceil(D/2),)
    angles = position * div_term                                           # (L, ceil(D/2))
    pe = jnp.zeros((max_len, 1, d_model), dtype=jnp.float32)
    pe = pe.at[:, 0, 0::2].set(jnp.sin(angles))
    if d_model % 2 != 0:
        pe = pe.at[:, 0, 1::2].set(jnp.cos(angles)[:, :-1])
    else:
        pe = pe.at[:, 0, 1::2].set(jnp.cos(angles))
    return pe.astype(dtype)


# --------------------------------------------------------------------------
# Pallas kernels
# --------------------------------------------------------------------------
def _pe_add_kernel(x_ref, pe_ref, o_ref):
    # x_ref: (TS, B, D), pe_ref: (TS, 1, D) -> broadcast add over batch axis.
    o_ref[...] = (x_ref[...] + pe_ref[...]).astype(o_ref.dtype)


def _pe_add_dropout_kernel(x_ref, pe_ref, bits_ref, o_ref, *, threshold, scale):
    # Inverted dropout on (x + pe).  keep decision is an integer-domain
    # compare on raw uint32 random bits (no shift / convert / fmul chain).
    y = x_ref[...] + pe_ref[...]                                  # (TS, B, D)
    keep = bits_ref[...] >= jnp.uint32(threshold)                 # (TS, B, D)
    scaled = y * jnp.asarray(scale, dtype=y.dtype)
    o_ref[...] = jnp.where(keep, scaled, jnp.zeros_like(y)).astype(o_ref.dtype)


# --------------------------------------------------------------------------
# Wrapper
# --------------------------------------------------------------------------
def _pick_seq_tile(S, B, D, itemsize, target_bytes=2 * 1024 * 1024):
    """Seq-axis tile size so each (TS, B, D) tile is ~target_bytes."""
    per_row = max(1, B * D * itemsize)
    ts = max(1, target_bytes // per_row)
    return int(min(S, ts))


def positional_encoding_forward(x, pe, *, dropout_p=0.1, training=False, rng_key=None):
    """x: (seq_len, batch, d_model);  pe: (max_len, 1, d_model)."""
    S, B, D = x.shape
    pe_s = pe[:S].astype(x.dtype)                 # (S, 1, D) — static slice, plain JAX

    TS = _pick_seq_tile(S, B, D, jnp.dtype(x.dtype).itemsize)
    grid = (pl.cdiv(S, TS),)

    # Last two block dims equal the full array dims -> (8,128) constraint satisfied.
    # For typical d_model (multiple of 128) the output is lane-dense automatically.
    x_spec = pl.BlockSpec((TS, B, D), lambda i: (i, 0, 0))
    pe_spec = pl.BlockSpec((TS, 1, D), lambda i: (i, 0, 0))
    out_spec = pl.BlockSpec((TS, B, D), lambda i: (i, 0, 0))
    out_shape = jax.ShapeDtypeStruct((S, B, D), x.dtype)

    compiler_params = pltpu.CompilerParams(
        dimension_semantics=("parallel",),        # megacore sharding on v7x
        vmem_limit_bytes=32 * 1024 * 1024,
    )

    if (not training) or dropout_p == 0.0:
        return pl.pallas_call(
            _pe_add_kernel,
            grid=grid,
            in_specs=[x_spec, pe_spec],
            out_specs=out_spec,
            out_shape=out_shape,
            compiler_params=compiler_params,
        )(x, pe_s)

    if rng_key is None:
        rng_key = jax.random.PRNGKey(0)
    # Uniform uint32 bits for the whole tensor; tiled alongside x.
    bits = jax.random.bits(rng_key, (S, B, D), dtype=jnp.uint32)
    bits_spec = pl.BlockSpec((TS, B, D), lambda i: (i, 0, 0))

    p = float(dropout_p)
    threshold = min(int(round(p * float(1 << 32))), (1 << 32) - 1)
    scale = 1.0 / (1.0 - p)

    kernel = functools.partial(_pe_add_dropout_kernel, threshold=threshold, scale=scale)
    return pl.pallas_call(
        kernel,
        grid=grid,
        in_specs=[x_spec, pe_spec, bits_spec],
        out_specs=out_spec,
        out_shape=out_shape,
        compiler_params=compiler_params,
    )(x, pe_s, bits)


# --------------------------------------------------------------------------
# Demo / self-check
# --------------------------------------------------------------------------
if __name__ == "__main__":
    d_model = 32
    max_len = 64
    seq_len = 8
    batch = 2
    dropout_p = 0.1

    pe = build_pe(d_model, max_len)

    key = jax.random.PRNGKey(0)
    kx, kd = jax.random.split(key)
    x = jax.random.normal(kx, (seq_len, batch, d_model), dtype=jnp.float32)

    # Eval-mode (dropout = identity): exact check vs pure-JAX reference.
    out_eval = positional_encoding_forward(x, pe, dropout_p=dropout_p, training=False)
    out_eval = jax.block_until_ready(out_eval)
    ref_eval = x + pe[:seq_len]
    assert out_eval.shape == (seq_len, batch, d_model)
    assert jnp.allclose(out_eval, ref_eval, atol=1e-6, rtol=1e-6), "eval-mode mismatch"

    # Training-mode dropout: deterministic given the rng key, so value-check it.
    out_train = positional_encoding_forward(
        x, pe, dropout_p=dropout_p, training=True, rng_key=kd
    )
    out_train = jax.block_until_ready(out_train)
    assert out_train.shape == (seq_len, batch, d_model)

    bits_ref = jax.random.bits(kd, (seq_len, batch, d_model), dtype=jnp.uint32)
    thr = min(int(round(dropout_p * float(1 << 32))), (1 << 32) - 1)
    keep_ref = bits_ref >= jnp.uint32(thr)
    ref_train = jnp.where(keep_ref, ref_eval * (1.0 / (1.0 - dropout_p)), 0.0)
    assert jnp.allclose(out_train, ref_train, atol=1e-6, rtol=1e-6), "train-mode mismatch"

    print("KERNEL_OK")
</pallas_src>

<mosaic_0001>
module attributes {stable_mosaic.version = 11 : i64} {
  func.func @_pe_add_kernel(%arg0: i32, %arg1: memref<8x2x32xf32, #tpu.memory_space<vmem>>, %arg2: memref<8x1x32xf32, #tpu.memory_space<vmem>>, %arg3: memref<8x2x32xf32, #tpu.memory_space<vmem>>) attributes {dimension_semantics = [#tpu.dimension_semantics<parallel>], iteration_bounds = array<i64: 1>, scalar_prefetch = 0 : i64, scratch_operands = 0 : i64, tpu.core_type = #tpu.core_type<tc>, window_params = [{transform_indices = @transform_0, window_bounds = array<i64: 8, 2, 32>}, {transform_indices = @transform_1, window_bounds = array<i64: 8, 1, 32>}, {transform_indices = @transform_2, window_bounds = array<i64: 8, 2, 32>}]} {
    %c0 = arith.constant 0 : index
    %c0_0 = arith.constant 0 : index
    %c0_1 = arith.constant 0 : index
    %0 = vector.load %arg1[%c0, %c0_0, %c0_1] : memref<8x2x32xf32, #tpu.memory_space<vmem>>, vector<8x2x32xf32>
    %c0_2 = arith.constant 0 : index
    %c0_3 = arith.constant 0 : index
    %c0_4 = arith.constant 0 : index
    %1 = vector.load %arg2[%c0_2, %c0_3, %c0_4] : memref<8x1x32xf32, #tpu.memory_space<vmem>>, vector<8x1x32xf32>
    %2 = vector.broadcast %1 : vector<8x1x32xf32> to vector<8x2x32xf32>
    %3 = arith.addf %0, %2 : vector<8x2x32xf32>
    %c0_5 = arith.constant 0 : index
    %c0_6 = arith.constant 0 : index
    %c0_7 = arith.constant 0 : index
    %4 = vector.load %arg3[%c0_5, %c0_6, %c0_7] : memref<8x2x32xf32, #tpu.memory_space<vmem>>, vector<8x2x32xf32>
    tpu.vector_store %arg3[%c0_5, %c0_6, %c0_7], %3 {strides = array<i32>} : memref<8x2x32xf32, #tpu.memory_space<vmem>>, vector<8x2x32xf32>,
    return
  }
  func.func @transform_0(%arg0: i32) -> (i32, i32, i32) {
    %c0_i32 = arith.constant 0 : i32
    %c0_i32_0 = arith.constant 0 : i32
    %c0_i32_1 = arith.constant 0 : i32
    return %arg0, %c0_i32, %c0_i32_0 : i32, i32, i32
  }
  func.func @transform_1(%arg0: i32) -> (i32, i32, i32) {
    %c0_i32 = arith.constant 0 : i32
    %c0_i32_0 = arith.constant 0 : i32
    %c0_i32_1 = arith.constant 0 : i32
    return %arg0, %c0_i32, %c0_i32_0 : i32, i32, i32
  }
  func.func @transform_2(%arg0: i32) -> (i32, i32, i32) {
    %c0_i32 = arith.constant 0 : i32
    %c0_i32_0 = arith.constant 0 : i32
    %c0_i32_1 = arith.constant 0 : i32
    return %arg0, %c0_i32, %c0_i32_0 : i32, i32, i32
  }
}

</mosaic_0001>

<llo_original>
// kernel: tpu_custom_call.1
$region0: #{tpu_custom_call.1}
  #allocation0 [shape = 'u32[]', space=smem, size = 0x4, offset = 0x4, fixed_abs, tag = 'smem constant byte address 0x4 - core index']
  #allocation1 [shape = 'u32[72,128]{1,0:T(1,128)}', space=vmem, size = 0x9000, scoped, tag = 'internal scratch']
  %s0 = inlined_call_operand.hbm [shape: f32[8,2,32], index: 0, kind: input, shape index: {}]
  %s1 = inlined_call_operand.hbm [shape: f32[8,1,32], index: 1, kind: input, shape index: {}]
  %s2 = inlined_call_operand.hbm [shape: f32[8,2,32], index: 2, kind: output, shape index: {}]
  %s3 = sld [smem:[#allocation0]]
  $region26: #{tpu_custom_call.1} parent=0
    _
  %s5 = ssub.s32 1, %s3
  %s6 = scalar_select 0, %s5, %s3
  $region1: #{tpu_custom_call.1} parent=0
    #allocation2 [shape = 'u8[8192]{0}', space=vmem, size = 0x2000, scoped, tag = 'input window, operand 0, single buffered']
    #allocation3 [shape = 's32[1]{0}', space=sflag, size = 0x4, scoped, tag = 'scoped memory for tpu_custom_call.1']
    #allocation4 [shape = 's32[1]{0}', space=sflag, size = 0x4, scoped, tag = 'scoped memory for tpu_custom_call.1']
    #allocation5 [shape = 'u8[4096]{0}', space=vmem, size = 0x1000, scoped, tag = 'input window, operand 1, single buffered']
    #allocation6 [shape = 's32[1]{0}', space=sflag, size = 0x4, scoped, tag = 'scoped memory for tpu_custom_call.1']
    #allocation7 [shape = 'u8[8192]{0}', space=vmem, size = 0x2000, scoped, tag = 'output window, operand 0, single buffered']
    %7 = vsyncpa [#allocation3], 0
    %8 = vsyncpa [#allocation6], 0
    %9 = vsyncpa [#allocation4], 0
    // Predicated region
    $region2: #{tpu_custom_call.1} parent=1 // pred_check
      _
    $region3: #{tpu_custom_call.1} parent=1 // pred_check_branch
      %11 = sbr.rel (0) target = $region5
    $region4: #{tpu_custom_call.1} parent=1 // pred_region
      %13 = vsyncadd [#allocation3], 0
      %s14 = sshll.u32 %s0, 4
      %s15 = int_to_ptr.hbm [resolvable:$true] %s14
      %s16 = sshll.u32 [#allocation2], 4
      %s17 = int_to_ptr.vmem [resolvable:$true] %s16
      %22 = dma.hbm_to_vmem [thread:$0]  %s15, 256, %s17, [#allocation3], 32, 32, 2
    $region5: #{tpu_custom_call.1} parent=1 // pred_fallthru
      _
    // Predicated region
    $region6: #{tpu_custom_call.1} parent=1 // pred_check
      _
    $region7: #{tpu_custom_call.1} parent=1 // pred_check_branch
      %24 = sbr.rel (0) target = $region9
    $region8: #{tpu_custom_call.1} parent=1 // pred_region
      %26 = vsyncadd [#allocation6], 0
      %s27 = sshll.u32 %s1, 4
      %s28 = int_to_ptr.hbm [resolvable:$true] %s27
      %s29 = sshll.u32 [#allocation5], 4
      %s30 = int_to_ptr.vmem [resolvable:$true] %s29
      %35 = dma.hbm_to_vmem [thread:$0]  %s28, 128, %s30, [#allocation6], 16, 16, 1
    $region9: #{tpu_custom_call.1} parent=1 // pred_fallthru
      _
    // Predicated region
    $region10: #{tpu_custom_call.1} parent=1 // pred_check
      _
    $region11: #{tpu_custom_call.1} parent=1 // pred_check_branch
      %37 = sbr.rel (0) target = $region13
    $region12: #{tpu_custom_call.1} parent=1 // pred_region
      %39 = dma.done [#allocation3], 256
    $region13: #{tpu_custom_call.1} parent=1 // pred_fallthru
      _
    // Predicated region
    $region14: #{tpu_custom_call.1} parent=1 // pred_check
      _
    $region15: #{tpu_custom_call.1} parent=1 // pred_check_branch
      %41 = sbr.rel (0) target = $region17
    $region16: #{tpu_custom_call.1} parent=1 // pred_region
      %43 = dma.done [#allocation6], 128
    $region17: #{tpu_custom_call.1} parent=1 // pred_fallthru
      _
    %v44 = vld [vmem:[#allocation2] sm:$0x3]
    %v45 = vld [vmem:[#allocation2 + $0x2] sm:$0x3]
    %v46 = vld [vmem:[#allocation2 + $0x4] sm:$0x3]
    %v47 = vld [vmem:[#allocation2 + $0x6] sm:$0x3]
    %v48 = vld [vmem:[#allocation2 + $0x8] sm:$0x3]
    %v49 = vld [vmem:[#allocation2 + $0xa] sm:$0x3]
    %v50 = vld [vmem:[#allocation2 + $0xc] sm:$0x3]
    %v51 = vld [vmem:[#allocation2 + $0xe] sm:$0x3]
    %v52 = vld [vmem:[#allocation5] sm:$0x1]
    %v53 = vld [vmem:[#allocation5 + $0x1] sm:$0x1]
    %v54 = vld [vmem:[#allocation5 + $0x2] sm:$0x1]
    %v55 = vld [vmem:[#allocation5 + $0x3] sm:$0x1]
    %v56 = vld [vmem:[#allocation5 + $0x4] sm:$0x1]
    %v57 = vld [vmem:[#allocation5 + $0x5] sm:$0x1]
    %v58 = vld [vmem:[#allocation5 + $0x6] sm:$0x1]
    %v59 = vld [vmem:[#allocation5 + $0x7] sm:$0x1]
    %v68 = vperm.slane %v52, 0
    %v69 = vperm.slane %v53, 0
    %v70 = vperm.slane %v54, 0
    %v71 = vperm.slane %v55, 0
    %v72 = vperm.slane %v56, 0
    %v73 = vperm.slane %v57, 0
    %v74 = vperm.slane %v58, 0
    %v75 = vperm.slane %v59, 0
    %v84 = vadd.f32 %v44, %v68
    %v85 = vadd.f32 %v45, %v69
    %v86 = vadd.f32 %v46, %v70
    %v87 = vadd.f32 %v47, %v71
    %v88 = vadd.f32 %v48, %v72
    %v89 = vadd.f32 %v49, %v73
    %v90 = vadd.f32 %v50, %v74
    %v91 = vadd.f32 %v51, %v75
    %vm92 = vcmask 254976
    %93 = vst.msk [vmem:[#allocation7] sm:$0x3] %vm92, %v84
    %94 = vst.msk [vmem:[#allocation7 + $0x2] sm:$0x3] %vm92, %v85
    %95 = vst.msk [vmem:[#allocation7 + $0x4] sm:$0x3] %vm92, %v86
    %96 = vst.msk [vmem:[#allocation7 + $0x6] sm:$0x3] %vm92, %v87
    %97 = vst.msk [vmem:[#allocation7 + $0x8] sm:$0x3] %vm92, %v88
    %98 = vst.msk [vmem:[#allocation7 + $0xa] sm:$0x3] %vm92, %v89
    %99 = vst.msk [vmem:[#allocation7 + $0xc] sm:$0x3] %vm92, %v90
    %100 = vst.msk [vmem:[#allocation7 + $0xe] sm:$0x3] %vm92, %v91
    // Predicated region
    $region18: #{tpu_custom_call.1} parent=1 // pred_check
      _
    $region19: #{tpu_custom_call.1} parent=1 // pred_check_branch
      %102 = sbr.rel (0) target = $region21
    $region20: #{tpu_custom_call.1} parent=1 // pred_region
      %104 = vsyncadd [#allocation4], 0
      %s105 = sshll.u32 [#allocation7], 4
      %s106 = int_to_ptr.vmem [resolvable:$true] %s105
      %s107 = sshll.u32 %s2, 4
      %s108 = int_to_ptr.hbm [resolvable:$true] %s107
      %113 = dma.vmem_to_hbm [thread:$0]  %s106, 256, %s108, [#allocation4], 32, 32, 2
    $region21: #{tpu_custom_call.1} parent=1 // pred_fallthru
      _
    // Predicated region
    $region22: #{tpu_custom_call.1} parent=1 // pred_check
      _
    $region23: #{tpu_custom_call.1} parent=1 // pred_check_branch
      %115 = sbr.rel (0) target = $region25
    $region24: #{tpu_custom_call.1} parent=1 // pred_region
      %117 = dma.done [#allocation4], 256
    $region25: #{tpu_custom_call.1} parent=1 // pred_fallthru
      _
    %118 = vsyncpa [#allocation3], 1
    %119 = vsyncpa [#allocation6], 1
    %120 = vsyncpa [#allocation4], 1

</llo_original>
